<compile_context>
chip_gen: v5e
topology: v5e:2x2
jax: 0.10.0
libtpu: 0.0.40
codegen_flags: <defaults>
</compile_context>

<pallas_src>
import jax
import jax.numpy as jnp
from jax.experimental import pallas as pl
from jax.experimental.pallas import tpu as pltpu


_SUBLANE = 8       # row (sublane) granularity
_N_ALIGN = 128     # hidden-dim padding; use 256 for non-toy sizes on v6e/v7x
_TM_TARGET = 256   # target rows per tile (~85% of HBM roofline on v6e)


def _round_up(n, m):
    return ((n + m - 1) // m) * m


def _embed_kernel(x_ref, w1_ref, b1_ref, w2_ref, b2_ref, o_ref):
    """Fused shared-weight 2-layer MLP: relu(x @ W1 + b1) @ W2 + b2.

    x / W1 / W2 may be bf16 (MXU operands, f32 accumulation requested via
    preferred_element_type); biases and all element-wise math stay in f32.
    x_ref: (TM, d_in), o_ref: (TM, d_emb) — branch dim squeezed by BlockSpec.
    """
    h = jnp.dot(x_ref[...], w1_ref[...], preferred_element_type=jnp.float32)
    h = jnp.maximum(h + b1_ref[...], 0.0)                       # f32 VPU
    y = jnp.dot(h.astype(w2_ref.dtype), w2_ref[...],
                preferred_element_type=jnp.float32)
    o_ref[...] = (y + b2_ref[...]).astype(o_ref.dtype)


def prepare_params(params, compute_dtype=jnp.float32, out_dtype=jnp.float32):
    """Zero-pad the shared MLP weights along the hidden dim (one-time cost)
    and cast the matmul operands to `compute_dtype`."""
    w1, b1, w2, b2 = params
    d_in, hidden = w1.shape
    d_emb = w2.shape[1]
    hp = _round_up(hidden, _N_ALIGN)

    w1p = jnp.zeros((d_in, hp), compute_dtype).at[:, :hidden].set(
        w1.astype(compute_dtype))
    b1p = jnp.zeros((1, hp), jnp.float32).at[:, :hidden].set(
        b1.reshape(1, hidden).astype(jnp.float32))
    w2p = jnp.zeros((hp, d_emb), compute_dtype).at[:hidden, :].set(
        w2.astype(compute_dtype))
    b2p = b2.reshape(1, d_emb).astype(jnp.float32)

    return {
        "weights": (w1p, b1p, w2p, b2p),
        "dims": (d_in, hidden, d_emb),
        "compute_dtype": compute_dtype,
        "out_dtype": out_dtype,
    }


def _embed_stacked(x, w1p, b1p, w2p, b2p, tm, out_dtype):
    """One row-tiled Pallas launch over all branches, weights VMEM-resident."""
    n_branch, bp, d_in = x.shape
    hp = w1p.shape[1]
    d_emb = w2p.shape[1]
    n_row_tiles = bp // tm

    cbytes = jnp.dtype(x.dtype).itemsize
    obytes = jnp.dtype(out_dtype).itemsize
    weight_bytes = (w1p.size + w2p.size) * cbytes + (b1p.size + b2p.size) * 4
    x_tile_bytes = tm * d_in * cbytes
    o_tile_bytes = tm * d_emb * obytes
    # 2x double-buffered activation/output tiles + (conservatively) 2x the
    # resident weights + headroom; clamp to v7x's 64 MiB physical budget.
    vmem_budget = 2 * (x_tile_bytes + o_tile_bytes) + 2 * weight_bytes + (4 << 20)
    vmem_budget = int(min(max(vmem_budget, 8 << 20), 64 << 20))

    bytes_accessed = (x.size * cbytes + weight_bytes
                      + n_branch * bp * d_emb * obytes)
    flops = 2 * n_branch * bp * (d_in * hp + hp * d_emb)

    return pl.pallas_call(
        _embed_kernel,
        out_shape=jax.ShapeDtypeStruct((n_branch, bp, d_emb), out_dtype),
        grid=(n_branch, n_row_tiles),
        in_specs=[
            pl.BlockSpec((None, tm, d_in), lambda b, i: (b, i, 0)),   # x tile
            pl.BlockSpec((d_in, hp), lambda b, i: (0, 0)),            # W1 resident
            pl.BlockSpec((1, hp), lambda b, i: (0, 0)),               # b1 resident
            pl.BlockSpec((hp, d_emb), lambda b, i: (0, 0)),           # W2 resident
            pl.BlockSpec((1, d_emb), lambda b, i: (0, 0)),            # b2 resident
        ],
        out_specs=pl.BlockSpec((None, tm, d_emb), lambda b, i: (b, i, 0)),
        compiler_params=pltpu.CompilerParams(
            dimension_semantics=("parallel", "parallel"),
            vmem_limit_bytes=vmem_budget),
        cost_estimate=pl.CostEstimate(
            flops=flops, transcendentals=0, bytes_accessed=bytes_accessed),
    )(x, w1p, b1p, w2p, b2p)


def safeness_net_forward(prepared, anchor, *neighbors):
    """SafenessNet.forward: shared embedding of anchor and each neighbor,
    fused into one row-tiled Pallas launch (branch = leading grid axis)."""
    w1p, b1p, w2p, b2p = prepared["weights"]
    d_in, _, d_emb = prepared["dims"]
    compute_dtype = prepared["compute_dtype"]
    out_dtype = prepared["out_dtype"]

    inputs = (anchor,) + tuple(neighbors)
    n_branch = len(inputs)
    batch = anchor.shape[0]
    for n in inputs:
        assert n.shape == (batch, d_in), (
            "all branches must share the anchor's (batch, d_in) shape")

    # Single stack (one HBM write); no zero-padding of d_in, no concat+set.
    x = jnp.stack(inputs, axis=0).astype(compute_dtype)     # (n_branch, B, d_in)

    # Row tile: multiple of 8 sublanes, capped at _TM_TARGET; pad batch only
    # if needed so the grid divides evenly (padded rows are sliced off below).
    bp = _round_up(batch, _SUBLANE)
    tm = min(_TM_TARGET, bp)
    bp = _round_up(bp, tm)
    if bp != batch:
        x = jnp.pad(x, ((0, 0), (0, bp - batch), (0, 0)))

    out = _embed_stacked(x, w1p, b1p, w2p, b2p, tm, out_dtype)  # (n_branch, bp, d_emb)
    return tuple(out[i, :batch, :] for i in range(n_branch))


def embed(prepared, x):
    """SafenessNet.embed: shared embedding of a single input batch."""
    return safeness_net_forward(prepared, x)[0]


def init_params(key, d_in, hidden, d_emb):
    k1, k2, k3, k4 = jax.random.split(key, 4)
    w1 = jax.random.normal(k1, (d_in, hidden), jnp.float32) / jnp.sqrt(d_in)
    b1 = 0.1 * jax.random.normal(k3, (hidden,), jnp.float32)
    w2 = jax.random.normal(k2, (hidden, d_emb), jnp.float32) / jnp.sqrt(hidden)
    b2 = 0.1 * jax.random.normal(k4, (d_emb,), jnp.float32)
    return (w1, b1, w2, b2)


if __name__ == "__main__":
    key = jax.random.PRNGKey(0)
    kp, ka, kn1, kn2 = jax.random.split(key, 4)

    B, D_IN, HIDDEN, D_EMB = 8, 32, 64, 16
    params = init_params(kp, D_IN, HIDDEN, D_EMB)

    anchor = jax.random.normal(ka, (B, D_IN), jnp.float32)
    neighbor1 = jax.random.normal(kn1, (B, D_IN), jnp.float32)
    neighbor2 = jax.random.normal(kn2, (B, D_IN), jnp.float32)

    # Plain-JAX reference for the embedding net.
    def ref_embed(x, p):
        w1, b1, w2, b2 = p
        return jnp.maximum(x @ w1 + b1, 0.0) @ w2 + b2

    refs = tuple(ref_embed(x, params) for x in (anchor, neighbor1, neighbor2))

    # f32 path (exact vs reference).
    prep_f32 = prepare_params(params, jnp.float32)
    fwd_f32 = jax.jit(lambda a, n1, n2: safeness_net_forward(prep_f32, a, n1, n2))
    outs_f32 = jax.block_until_ready(fwd_f32(anchor, neighbor1, neighbor2))
    assert len(outs_f32) == 3
    for o, r in zip(outs_f32, refs):
        assert o.shape == (B, D_EMB)
        assert jnp.allclose(o, r, atol=1e-5, rtol=1e-5)

    # bf16 matmul-operand path (f32 accumulation, f32 output) — halves the
    # weight/activation HBM bytes; element-wise math stays f32 (v5e-safe).
    prep_bf16 = prepare_params(params, jnp.bfloat16)
    fwd_bf16 = jax.jit(lambda a, n1, n2: safeness_net_forward(prep_bf16, a, n1, n2))
    outs_bf16 = jax.block_until_ready(fwd_bf16(anchor, neighbor1, neighbor2))
    for o, r in zip(outs_bf16, refs):
        assert o.shape == (B, D_EMB)
        assert jnp.allclose(o, r, atol=5e-2, rtol=5e-2)

    # embed() path (single branch).
    e = jax.block_until_ready(jax.jit(lambda x: embed(prep_f32, x))(anchor))
    assert e.shape == (B, D_EMB)
    assert jnp.allclose(e, refs[0], atol=1e-5, rtol=1e-5)

    print("KERNEL_OK")
</pallas_src>

<mosaic_0001>
module attributes {stable_mosaic.version = 11 : i64} {
  func.func @_embed_kernel(%arg0: i32, %arg1: i32, %arg2: memref<1x8x32xf32, #tpu.memory_space<vmem>>, %arg3: memref<32x128xf32, #tpu.memory_space<vmem>>, %arg4: memref<1x128xf32, #tpu.memory_space<vmem>>, %arg5: memref<128x16xf32, #tpu.memory_space<vmem>>, %arg6: memref<1x16xf32, #tpu.memory_space<vmem>>, %arg7: memref<1x8x16xf32, #tpu.memory_space<vmem>>) attributes {dimension_semantics = [#tpu.dimension_semantics<parallel>, #tpu.dimension_semantics<parallel>], iteration_bounds = array<i64: 3, 1>, scalar_prefetch = 0 : i64, scratch_operands = 0 : i64, tpu.core_type = #tpu.core_type<tc>, window_params = [{transform_indices = @transform_0, window_bounds = array<i64: 1, 8, 32>}, {pipeline_mode = #tpu.pipeline_mode<synchronous>, transform_indices = @transform_1, window_bounds = array<i64: 32, 128>}, {pipeline_mode = #tpu.pipeline_mode<synchronous>, transform_indices = @transform_2, window_bounds = array<i64: 1, 128>}, {pipeline_mode = #tpu.pipeline_mode<synchronous>, transform_indices = @transform_3, window_bounds = array<i64: 128, 16>}, {pipeline_mode = #tpu.pipeline_mode<synchronous>, transform_indices = @transform_4, window_bounds = array<i64: 1, 16>}, {transform_indices = @transform_5, window_bounds = array<i64: 1, 8, 16>}]} {
    %c0 = arith.constant 0 : index
    %c0_0 = arith.constant 0 : index
    %c0_1 = arith.constant 0 : index
    %0 = vector.load %arg2[%c0, %c0_0, %c0_1] : memref<1x8x32xf32, #tpu.memory_space<vmem>>, vector<1x8x32xf32>
    %1 = vector.shape_cast %0 : vector<1x8x32xf32> to vector<8x32xf32>
    %c0_2 = arith.constant 0 : index
    %c0_3 = arith.constant 0 : index
    %2 = vector.load %arg3[%c0_2, %c0_3] : memref<32x128xf32, #tpu.memory_space<vmem>>, vector<32x128xf32>
    %cst = arith.constant dense<0.000000e+00> : vector<8x128xf32>
    %3 = tpu.matmul %1, %2, %cst {dimension_numbers = #tpu.dot_dimension_numbers<[1], [0], [0], [1], [0, 0, 1, 1], [], []>} : vector<8x32xf32>, vector<32x128xf32>, vector<8x128xf32> -> vector<8x128xf32>
    %c0_4 = arith.constant 0 : index
    %c0_5 = arith.constant 0 : index
    %4 = vector.load %arg4[%c0_4, %c0_5] : memref<1x128xf32, #tpu.memory_space<vmem>>, vector<1x128xf32>
    %5 = vector.broadcast %4 : vector<1x128xf32> to vector<8x128xf32>
    %6 = arith.addf %3, %5 : vector<8x128xf32>
    %cst_6 = arith.constant 0.000000e+00 : f32
    %7 = vector.broadcast %cst_6 : f32 to vector<8x128xf32>
    %8 = arith.maximumf %6, %7 : vector<8x128xf32>
    %c0_7 = arith.constant 0 : index
    %c0_8 = arith.constant 0 : index
    %9 = vector.load %arg5[%c0_7, %c0_8] : memref<128x16xf32, #tpu.memory_space<vmem>>, vector<128x16xf32>
    %cst_9 = arith.constant dense<0.000000e+00> : vector<8x16xf32>
    %10 = tpu.matmul %8, %9, %cst_9 {dimension_numbers = #tpu.dot_dimension_numbers<[1], [0], [0], [1], [0, 0, 1, 1], [], []>} : vector<8x128xf32>, vector<128x16xf32>, vector<8x16xf32> -> vector<8x16xf32>
    %c0_10 = arith.constant 0 : index
    %c0_11 = arith.constant 0 : index
    %11 = vector.load %arg6[%c0_10, %c0_11] : memref<1x16xf32, #tpu.memory_space<vmem>>, vector<1x16xf32>
    %12 = vector.broadcast %11 : vector<1x16xf32> to vector<8x16xf32>
    %13 = arith.addf %10, %12 : vector<8x16xf32>
    %c0_12 = arith.constant 0 : index
    %c0_13 = arith.constant 0 : index
    %c0_14 = arith.constant 0 : index
    %14 = vector.load %arg7[%c0_12, %c0_13, %c0_14] : memref<1x8x16xf32, #tpu.memory_space<vmem>>, vector<1x8x16xf32>
    %15 = vector.shape_cast %14 : vector<1x8x16xf32> to vector<8x16xf32>
    %16 = vector.shape_cast %13 : vector<8x16xf32> to vector<1x8x16xf32>
    tpu.vector_store %arg7[%c0_12, %c0_13, %c0_14], %16 {strides = array<i32>} : memref<1x8x16xf32, #tpu.memory_space<vmem>>, vector<1x8x16xf32>,
    return
  }
  func.func @transform_0(%arg0: i32, %arg1: i32) -> (i32, i32, i32) {
    %c0_i32 = arith.constant 0 : i32
    %c0_i32_0 = arith.constant 0 : i32
    return %arg0, %arg1, %c0_i32 : i32, i32, i32
  }
  func.func @transform_1(%arg0: i32, %arg1: i32) -> (i32, i32) {
    %c0_i32 = arith.constant 0 : i32
    %c0_i32_0 = arith.constant 0 : i32
    %c0_i32_1 = arith.constant 0 : i32
    return %c0_i32, %c0_i32_0 : i32, i32
  }
  func.func @transform_2(%arg0: i32, %arg1: i32) -> (i32, i32) {
    %c0_i32 = arith.constant 0 : i32
    %c0_i32_0 = arith.constant 0 : i32
    %c0_i32_1 = arith.constant 0 : i32
    return %c0_i32, %c0_i32_0 : i32, i32
  }
  func.func @transform_3(%arg0: i32, %arg1: i32) -> (i32, i32) {
    %c0_i32 = arith.constant 0 : i32
    %c0_i32_0 = arith.constant 0 : i32
    %c0_i32_1 = arith.constant 0 : i32
    return %c0_i32, %c0_i32_0 : i32, i32
  }
  func.func @transform_4(%arg0: i32, %arg1: i32) -> (i32, i32) {
    %c0_i32 = arith.constant 0 : i32
    %c0_i32_0 = arith.constant 0 : i32
    %c0_i32_1 = arith.constant 0 : i32
    return %c0_i32, %c0_i32_0 : i32, i32
  }
  func.func @transform_5(%arg0: i32, %arg1: i32) -> (i32, i32, i32) {
    %c0_i32 = arith.constant 0 : i32
    %c0_i32_0 = arith.constant 0 : i32
    return %arg0, %arg1, %c0_i32 : i32, i32, i32
  }
}

</mosaic_0001>

<llo_original>
// kernel: _lambda_.1
$region0: #{_lambda_.1}
  #allocation0 [shape = 'u32[]', space=smem, size = 0x4, offset = 0x4, fixed_abs, tag = 'smem constant byte address 0x4 - core index']
  #allocation1 [shape = 'u32[72,128]{1,0:T(1,128)}', space=vmem, size = 0x9000, scoped, tag = 'internal scratch']
  %s0 = inlined_call_operand.vmem [shape: f32[3,8,32], index: 0, kind: input, shape index: {}]
  %s1 = inlined_call_operand.vmem [shape: f32[32,128], index: 1, kind: input, shape index: {}]
  %s2 = inlined_call_operand.vmem [shape: f32[1,128], index: 2, kind: input, shape index: {}]
  %s3 = inlined_call_operand.hbm [shape: f32[128,16], index: 3, kind: input, shape index: {}]
  %s4 = inlined_call_operand.vmem [shape: f32[1,16], index: 4, kind: input, shape index: {}]
  %s5 = inlined_call_operand.vmem [shape: f32[3,8,16], index: 5, kind: output, shape index: {}]
  %s6 = sld [smem:[#allocation0]]
  $region57: #{_lambda_.1} parent=0
    _
  %s8 = ssub.s32 1, %s6
  %s9 = scalar_select 0, %s8, %s6
  $region1: #{_lambda_.1} parent=0
    #allocation2 [shape = 'u8[65536]{0}', space=vmem, size = 0x10000, scoped, tag = 'input window, operand 3, single buffered']
    #allocation3 [shape = 's32[2]{0}', space=sflag, size = 0x8, scoped, tag = 'scoped memory for _lambda_.1']
    %10 = vsyncpa [#allocation3], 0
    loop: start=0, step=1, limit=5
    $region2: #{_lambda_.1} parent=1 // loop_pre_header
      _
    $region3: #{_lambda_.1} parent=1 // loop_header
      %s12 = sphi 0, %s16
      %p13 = scmp.ge.s32.totalorder %s12, 5
      %s19 = sphi 0, %s31
      %s20 = sphi 0, %s27
      %s21 = sphi 0, %s19
      %s22 = sphi 0, %s20
      %s23 = sphi 0, %s21
      %s24 = sphi 0, %s22
      %s36 = sphi 0, %s38
      %s39 = sphi 0, %s36
      %s40 = sphi 0, %s39
      %s56 = sphi 0, %s40
      %s60 = sphi 0, %s60
      %s62 = sphi 0, %s60
      %s63 = sphi 0, %s62
      %s77 = sphi 0, %s63
      %s81 = sphi 0, %s81
      %s83 = sphi 0, %s81
      %s84 = sphi 0, %s83
      %s98 = sphi 0, %s84
      %s102 = sphi 0, %s102
      %s104 = sphi 0, %s102
      %s105 = sphi 0, %s104
      %s119 = sphi 0, %s105
      %s123 = sphi 0, %s123
      %s125 = sphi 0, %s123
      %s126 = sphi 0, %s125
      %s140 = sphi 0, %s126
      %s148 = sphi 0, %s150
      %s151 = sphi 0, %s148
      %s152 = sphi 0, %s151
      %s168 = sphi 0, %s152
    $region4: #{_lambda_.1} parent=1 // loop_header_branch
      %15 = sbr.rel (%p13) target = $region8
    $region5: #{_lambda_.1} parent=1 // loop_body
      %s17 = ssub.s32 %s12, 1
      %s18 = ssub.s32 %s12, 2
      %s25 = sadd.s32 1, %s20
      %p26 = scmp.ge.s32.totalorder %s25, 1
      %s27 = scalar_select %p26, 0, %s25
      %s28 = sadd.s32 1, %s19
      %s29 = scalar_select %p26, %s28, %s19
      %p30 = scmp.ge.s32.totalorder %s29, 3
      %s31 = scalar_select %p30, 0, %s29
      %s32 = ssub.s32 %s19, %s31
      %s33 = ssub.s32 %s20, %s27
      %s34 = sor.u32 %s32, %s33
      %p35 = scmp.eq.s32.totalorder %s34, 0
      %s37 = sadd.s32 %s36, 1
      %s38 = scalar_select %p35, %s36, %s37
      %p41 = pneg %p35
      %p42 = scmp.eq.s32.totalorder %s12, 2
      %p43 = por %p41, %p42
      %p44 = scmp.ne.s32.totalorder %s36, %s39
      %p45 = scmp.eq.s32.totalorder %s12, 0
      %p46 = por %p44, %p45
      %p47 = scmp.ne.s32.totalorder %s36, %s39
      %p48 = scmp.eq.s32.totalorder %s17, 2
      %p49 = por %p47, %p48
      %p50 = scmp.ne.s32.totalorder %s39, %s40
      %p51 = scmp.eq.s32.totalorder %s17, 0
      %p52 = por %p50, %p51
      %p53 = scmp.ne.s32.totalorder %s39, %s40
      %p54 = scmp.eq.s32.totalorder %s18, 2
      %p55 = por %p53, %p54
      %p57 = scmp.ne.s32.totalorder %s40, %s56
      %p58 = scmp.eq.s32.totalorder %s18, 0
      %p59 = por %p57, %p58
      %s61 = sadd.s32 %s60, 1
      %p64 = scmp.eq.s32.totalorder %s12, 2
      %p65 = scmp.ne.s32.totalorder %s60, %s62
      %p66 = scmp.eq.s32.totalorder %s12, 0
      %p67 = por %p65, %p66
      %p68 = scmp.ne.s32.totalorder %s60, %s62
      %p69 = scmp.eq.s32.totalorder %s17, 2
      %p70 = por %p68, %p69
      %p71 = scmp.ne.s32.totalorder %s62, %s63
      %p72 = scmp.eq.s32.totalorder %s17, 0
      %p73 = por %p71, %p72
      %p74 = scmp.ne.s32.totalorder %s62, %s63
      %p75 = scmp.eq.s32.totalorder %s18, 2
      %p76 = por %p74, %p75
      %p78 = scmp.ne.s32.totalorder %s63, %s77
      %p79 = scmp.eq.s32.totalorder %s18, 0
      %p80 = por %p78, %p79
      %s82 = sadd.s32 %s81, 1
      %p85 = scmp.eq.s32.totalorder %s12, 2
      %p86 = scmp.ne.s32.totalorder %s81, %s83
      %p87 = scmp.eq.s32.totalorder %s12, 0
      %p88 = por %p86, %p87
      %p89 = scmp.ne.s32.totalorder %s81, %s83
      %p90 = scmp.eq.s32.totalorder %s17, 2
      %p91 = por %p89, %p90
      %p92 = scmp.ne.s32.totalorder %s83, %s84
      %p93 = scmp.eq.s32.totalorder %s17, 0
      %p94 = por %p92, %p93
      %p95 = scmp.ne.s32.totalorder %s83, %s84
      %p96 = scmp.eq.s32.totalorder %s18, 2
      %p97 = por %p95, %p96
      %p99 = scmp.ne.s32.totalorder %s84, %s98
      %p100 = scmp.eq.s32.totalorder %s18, 0
      %p101 = por %p99, %p100
      %s103 = sadd.s32 %s102, 1
      %p106 = scmp.eq.s32.totalorder %s12, 2
      %p107 = scmp.ne.s32.totalorder %s102, %s104
      %p108 = scmp.eq.s32.totalorder %s12, 0
      %p109 = por %p107, %p108
      %p110 = scmp.ne.s32.totalorder %s102, %s104
      %p111 = scmp.eq.s32.totalorder %s17, 2
      %p112 = por %p110, %p111
      %p113 = scmp.ne.s32.totalorder %s104, %s105
      %p114 = scmp.eq.s32.totalorder %s17, 0
      %p115 = por %p113, %p114
      %p116 = scmp.ne.s32.totalorder %s104, %s105
      %p117 = scmp.eq.s32.totalorder %s18, 2
      %p118 = por %p116, %p117
      %p120 = scmp.ne.s32.totalorder %s105, %s119
      %p121 = scmp.eq.s32.totalorder %s18, 0
      %p122 = por %p120, %p121
      %s124 = sadd.s32 %s123, 1
      %p127 = scmp.eq.s32.totalorder %s12, 2
      %p128 = scmp.ne.s32.totalorder %s123, %s125
      %p129 = scmp.eq.s32.totalorder %s12, 0
      %p130 = por %p128, %p129
      %p131 = scmp.ne.s32.totalorder %s123, %s125
      %p132 = scmp.eq.s32.totalorder %s17, 2
      %p133 = por %p131, %p132
      %p134 = scmp.ne.s32.totalorder %s125, %s126
      %p135 = scmp.eq.s32.totalorder %s17, 0
      %p136 = por %p134, %p135
      %p137 = scmp.ne.s32.totalorder %s125, %s126
      %p138 = scmp.eq.s32.totalorder %s18, 2
      %p139 = por %p137, %p138
      %p141 = scmp.ne.s32.totalorder %s126, %s140
      %p142 = scmp.eq.s32.totalorder %s18, 0
      %p143 = por %p141, %p142
      %s144 = ssub.s32 %s19, %s31
      %s145 = ssub.s32 %s20, %s27
      %s146 = sor.u32 %s144, %s145
      %p147 = scmp.eq.s32.totalorder %s146, 0
      %s149 = sadd.s32 %s148, 1
      %s150 = scalar_select %p147, %s148, %s149
      %p153 = pneg %p147
      %p154 = scmp.eq.s32.totalorder %s12, 2
      %p155 = por %p153, %p154
      %p156 = scmp.ne.s32.totalorder %s148, %s151
      %p157 = scmp.eq.s32.totalorder %s12, 0
      %p158 = por %p156, %p157
      %p159 = scmp.ne.s32.totalorder %s148, %s151
      %p160 = scmp.eq.s32.totalorder %s17, 2
      %p161 = por %p159, %p160
      %p162 = scmp.ne.s32.totalorder %s151, %s152
      %p163 = scmp.eq.s32.totalorder %s17, 0
      %p164 = por %p162, %p163
      %p165 = scmp.ne.s32.totalorder %s151, %s152
      %p166 = scmp.eq.s32.totalorder %s18, 2
      %p167 = por %p165, %p166
      %p169 = scmp.ne.s32.totalorder %s152, %s168
      %p170 = scmp.eq.s32.totalorder %s18, 0
      %p171 = por %p169, %p170
      %p172 = scmp.le.s32.totalorder 1, %s12
      %p173 = scmp.lt.s32.totalorder %s12, 4
      %p174 = pnand %p172, %p173
      %p175 = pneg %p174
      // Predicated region
      $region9: #{_lambda_.1} parent=5 // pred_check
        _
      $region10: #{_lambda_.1} parent=5 // pred_check_branch
        %177 = sbr.rel (%p174) target = $region12
      $region11: #{_lambda_.1} parent=5 // pred_region
        %s178 = ssub.s32 %s12, 1
        // Predicated region
        $region13: #{_lambda_.1} parent=11 // pred_check
          %p179 = pneg %p73
        $region14: #{_lambda_.1} parent=11 // pred_check_branch
          %181 = sbr.rel (%p179) target = $region16
        $region15: #{_lambda_.1} parent=11 // pred_region
          _
        $region16: #{_lambda_.1} parent=11 // pred_fallthru
          _
        // Predicated region
        $region17: #{_lambda_.1} parent=11 // pred_check
          %p182 = pneg %p94
        $region18: #{_lambda_.1} parent=11 // pred_check_branch
          %184 = sbr.rel (%p182) target = $region20
        $region19: #{_lambda_.1} parent=11 // pred_region
          _
        $region20: #{_lambda_.1} parent=11 // pred_fallthru
          _
        // Predicated region
        $region21: #{_lambda_.1} parent=11 // pred_check
          %p185 = pneg %p115
        $region22: #{_lambda_.1} parent=11 // pred_check_branch
          %187 = sbr.rel (%p185) target = $region24
        $region23: #{_lambda_.1} parent=11 // pred_region
          %189 = vsyncadd [#allocation3], 0
          %s190 = sshll.u32 %s3, 4
          %s191 = int_to_ptr.hbm [resolvable:$true] %s190
          %s192 = sshll.u32 [#allocation2], 4
          %s193 = int_to_ptr.vmem [resolvable:$true] %s192
          %198 = dma.hbm_to_vmem [thread:$0]  %s191, 2048, %s193, [#allocation3], 128, 128, 8
        $region24: #{_lambda_.1} parent=11 // pred_fallthru
          _
        // Predicated region
        $region25: #{_lambda_.1} parent=11 // pred_check
          %p199 = pneg %p136
        $region26: #{_lambda_.1} parent=11 // pred_check_branch
          %201 = sbr.rel (%p199) target = $region28
        $region27: #{_lambda_.1} parent=11 // pred_region
          _
        $region28: #{_lambda_.1} parent=11 // pred_fallthru
          _
      $region12: #{_lambda_.1} parent=5 // pred_fallthru
        _
      %p202 = scmp.lt.s32.totalorder %s12, 3
      // Predicated region
      $region29: #{_lambda_.1} parent=5 // pred_check
        %p203 = pneg %p202
      $region30: #{_lambda_.1} parent=5 // pred_check_branch
        %205 = sbr.rel (%p203) target = $region32
      $region31: #{_lambda_.1} parent=5 // pred_region
        // Predicated region
        $region33: #{_lambda_.1} parent=31 // pred_check
          %p206 = pneg %p46
        $region34: #{_lambda_.1} parent=31 // pred_check_branch
          %208 = sbr.rel (%p206) target = $region36
        $region35: #{_lambda_.1} parent=31 // pred_region
          %p209 = scmp.lt.s32.totalorder %s19, 2
          %s210 = scalar_select %p209, %s19, 2
          %p211 = scmp.lt.s32.totalorder %s20, 0
          %s212 = scalar_select %p211, %s20, 0
          %s213 = sadd.s32 %s212, %s210
          %s214 = smul.addr %s213, 8
          %s215 = scalar_lea.vmem %s0, %s214
        $region36: #{_lambda_.1} parent=31 // pred_fallthru
          _
      $region32: #{_lambda_.1} parent=5 // pred_fallthru
        _
      %p216 = scmp.le.s32.totalorder 1, %s12
      %p217 = scmp.lt.s32.totalorder %s12, 4
      %p218 = pnand %p216, %p217
      %p219 = pneg %p218
      // Predicated region
      $region37: #{_lambda_.1} parent=5 // pred_check
        _
      $region38: #{_lambda_.1} parent=5 // pred_check_branch
        %221 = sbr.rel (%p218) target = $region40
      $region39: #{_lambda_.1} parent=5 // pred_region
        %s222 = ssub.s32 %s12, 1
        // Predicated region
        $region41: #{_lambda_.1} parent=39 // pred_check
          %p223 = pneg %p115
        $region42: #{_lambda_.1} parent=39 // pred_check_branch
          %225 = sbr.rel (%p223) target = $region44
        $region43: #{_lambda_.1} parent=39 // pred_region
          %227 = dma.done [#allocation3], 2048
        $region44: #{_lambda_.1} parent=39 // pred_fallthru
          _
        %p228 = scmp.lt.s32.totalorder %s21, 2
        %s229 = scalar_select %p228, %s21, 2
        %p230 = scmp.lt.s32.totalorder %s22, 0
        %s231 = scalar_select %p230, %s22, 0
        %s232 = sadd.s32 %s231, %s229
        %s233 = smul.addr %s232, 8
        %s234 = scalar_lea.vmem %s0, %s233
        %p235 = pneg %p52
        %p236 = pneg %p49
        %p237 = pneg %p73
        %p238 = pneg %p70
        %p239 = pneg %p94
        %p240 = pneg %p91
        %p241 = pneg %p115
        %p242 = pneg %p112
        %p243 = pneg %p136
        %p244 = pneg %p133
        %p245 = pneg %p164
        %p246 = pneg %p161
        %p247 = scmp.lt.s32.totalorder %s21, 2
        %s248 = scalar_select %p247, %s21, 2
        %p249 = scmp.lt.s32.totalorder %s22, 0
        %s250 = scalar_select %p249, %s22, 0
        %s251 = sadd.s32 %s250, %s248
        %s252 = smul.addr %s251, 8
        %s253 = scalar_lea.vmem %s5, %s252
        %p254 = scmp.lt.s32.totalorder %s21, 2
        %s255 = scalar_select %p254, %s21, 2
        %p256 = scmp.lt.s32.totalorder %s22, 0
        %s257 = scalar_select %p256, %s22, 0
        %s258 = sadd.s32 %s257, %s255
        %s259 = smul.addr %s258, 8
        %s260 = scalar_lea.vmem %s0, %s259
        %p261 = scmp.lt.s32.totalorder %s21, 2
        %s262 = scalar_select %p261, %s21, 2
        %p263 = scmp.lt.s32.totalorder %s22, 0
        %s264 = scalar_select %p263, %s22, 0
        %s265 = sadd.s32 %s264, %s262
        %s266 = smul.addr %s265, 8
        %s267 = scalar_lea.vmem %s5, %s266
        %v268 = vld [vmem:[%s260] sm:$0xff]
        %v269 = vld [vmem:[%s1] sm:$0xff]
        %v270 = vld [vmem:[%s1 + $0x8] sm:$0xff]
        %v271 = vld [vmem:[%s1 + $0x10] sm:$0xff]
        %v272 = vld [vmem:[%s1 + $0x18] sm:$0xff]
        %v273 = vld [vmem:[%s2] sm:$0x1]
        %v275 = vperm.slane %v273, 0
        %vm277 = vcmask 261120
        %v279 = vsel %vm277, %v268, 0
        %281 = vmatpush.msra.mxu0 0.0
        %282 = vmatpush.msra.mxu0 0.0
        %283 = vmatpush.msra.mxu0 0.0
        %284 = vmatpush.msra.mxu0 0.0
        %285 = vmatpush.msra.mxu0 0.0
        %286 = vmatpush.msra.mxu0 0.0
        %287 = vmatpush.msra.mxu0 0.0
        %288 = vmatpush.msra.mxu0 0.0
        %289 = vmatpush.msra.mxu0 0.0
        %290 = vmatpush.msra.mxu0 0.0
        %291 = vmatpush.msra.mxu0 0.0
        %292 = vmatpush.msra.mxu0 0.0
        %293 = vmatpush.msra.mxu0 %v272
        %294 = vmatpush.msra.mxu0 %v271
        %295 = vmatpush.msra.mxu0 %v270
        %296 = vmatpush.msra.mxu0 %v269
        %297 = vmatmul.f32.gmra.mxu0 %v279
        %v298 = vpop.f32.mrf.mxu0
        %v299 = vadd.f32 %v275, %v298
        %300 = vdwg.mxu0
        %v301 = vmax.f32 %v299, 0.0
        %v302 = vld [vmem:[#allocation2] sm:$0xff]
        %v303 = vld [vmem:[#allocation2 + $0x8] sm:$0xff]
        %v304 = vld [vmem:[#allocation2 + $0x10] sm:$0xff]
        %v305 = vld [vmem:[#allocation2 + $0x18] sm:$0xff]
        %v306 = vld [vmem:[#allocation2 + $0x20] sm:$0xff]
        %v307 = vld [vmem:[#allocation2 + $0x28] sm:$0xff]
        %v308 = vld [vmem:[#allocation2 + $0x30] sm:$0xff]
        %v309 = vld [vmem:[#allocation2 + $0x38] sm:$0xff]
        %v310 = vld [vmem:[#allocation2 + $0x40] sm:$0xff]
        %v311 = vld [vmem:[#allocation2 + $0x48] sm:$0xff]
        %v312 = vld [vmem:[#allocation2 + $0x50] sm:$0xff]
        %v313 = vld [vmem:[#allocation2 + $0x58] sm:$0xff]
        %v314 = vld [vmem:[#allocation2 + $0x60] sm:$0xff]
        %v315 = vld [vmem:[#allocation2 + $0x68] sm:$0xff]
        %v316 = vld [vmem:[#allocation2 + $0x70] sm:$0xff]
        %v317 = vld [vmem:[#allocation2 + $0x78] sm:$0xff]
        %v318 = vld [vmem:[%s4] sm:$0x1]
        %v320 = vperm.slane %v318, 0
        %322 = vmatpush.msra.mxu0 %v317
        %323 = vmatpush.msra.mxu0 %v316
        %324 = vmatpush.msra.mxu0 %v315
        %325 = vmatpush.msra.mxu0 %v314
        %326 = vmatpush.msra.mxu0 %v313
        %327 = vmatpush.msra.mxu0 %v312
        %328 = vmatpush.msra.mxu0 %v311
        %329 = vmatpush.msra.mxu0 %v310
        %330 = vmatpush.msra.mxu0 %v309
        %331 = vmatpush.msra.mxu0 %v308
        %332 = vmatpush.msra.mxu0 %v307
        %333 = vmatpush.msra.mxu0 %v306
        %334 = vmatpush.msra.mxu0 %v305
        %335 = vmatpush.msra.mxu0 %v304
        %336 = vmatpush.msra.mxu0 %v303
        %337 = vmatpush.msra.mxu0 %v302
        %338 = vmatmul.f32.gmra.mxu0 %v301
        %v339 = vpop.f32.mrf.mxu0
        %v340 = vadd.f32 %v320, %v339
        %341 = vdwg.mxu0
        %vm342 = vcmask 130048
        %343 = vst.msk [vmem:[%s267] sm:$0xff] %vm342, %v340
        %p344 = scmp.lt.s32.totalorder %s21, 2
        %s345 = scalar_select %p344, %s21, 2
        %p346 = scmp.lt.s32.totalorder %s22, 0
        %s347 = scalar_select %p346, %s22, 0
        %s348 = sadd.s32 %s347, %s345
        %s349 = smul.addr %s348, 8
        %s350 = scalar_lea.vmem %s5, %s349
        // Predicated region
        $region45: #{_lambda_.1} parent=39 // pred_check
          %p351 = pneg %p161
        $region46: #{_lambda_.1} parent=39 // pred_check_branch
          %353 = sbr.rel (%p351) target = $region48
        $region47: #{_lambda_.1} parent=39 // pred_region
          _
        $region48: #{_lambda_.1} parent=39 // pred_fallthru
          _
      $region40: #{_lambda_.1} parent=5 // pred_fallthru
        _
      %p354 = scmp.le.s32.totalorder 2, %s12
      // Predicated region
      $region49: #{_lambda_.1} parent=5 // pred_check
        %p355 = pneg %p354
      $region50: #{_lambda_.1} parent=5 // pred_check_branch
        %357 = sbr.rel (%p355) target = $region52
      $region51: #{_lambda_.1} parent=5 // pred_region
        %s358 = ssub.s32 %s12, 2
        // Predicated region
        $region53: #{_lambda_.1} parent=51 // pred_check
          %p359 = pneg %p167
        $region54: #{_lambda_.1} parent=51 // pred_check_branch
          %361 = sbr.rel (%p359) target = $region56
        $region55: #{_lambda_.1} parent=51 // pred_region
          %p362 = scmp.lt.s32.totalorder %s23, 2
          %s363 = scalar_select %p362, %s23, 2
          %p364 = scmp.lt.s32.totalorder %s24, 0
          %s365 = scalar_select %p364, %s24, 0
          %s366 = sadd.s32 %s365, %s363
          %s367 = smul.addr %s366, 8
          %s368 = scalar_lea.vmem %s5, %s367
        $region56: #{_lambda_.1} parent=51 // pred_fallthru
          _
      $region52: #{_lambda_.1} parent=5 // pred_fallthru
        _
    $region6: #{_lambda_.1} parent=1 // loop_footer
      %s16 = sadd.s32 1, %s12
    $region7: #{_lambda_.1} parent=1 // loop_footer_branch
      %11 = sbr.rel target = $region3
    $region8: #{_lambda_.1} parent=1 // loop_exit
      _
    %369 = vsyncpa [#allocation3], 1
    %s370 = scalar_lea.sflag [#allocation3], 1
    %371 = vsyncpa %s370, 1

</llo_original>
